<compile_context>
chip_gen: v7x
topology: tpu7x:2x2x1
jax: 0.10.0
libtpu: 0.0.40
codegen_flags: <defaults>
</compile_context>

<pallas_src>
import jax
import jax.numpy as jnp
from jax.experimental import pallas as pl
from jax.experimental.pallas import tpu as pltpu


def _normalize_kernel(x_ref, scale_ref, bias_ref, out_ref):
    # x_ref/out_ref: (tile_r, tile_c) image tile.
    # scale_ref/bias_ref: (tile_r, 1) f32 per-row constants (lane-broadcast).
    x = x_ref[...].astype(jnp.float32)
    out_ref[...] = (x * scale_ref[...] + bias_ref[...]).astype(out_ref.dtype)


def _tile_byte_budget() -> int:
    """Per-buffer tile budget by TPU generation (HBM BW vs step-overhead trade)."""
    try:
        kind = jax.devices()[0].device_kind.lower()
    except Exception:
        kind = ""
    if any(tag in kind for tag in ("v2", "v3", "v4", "v5")):
        return 2 << 20   # v5e: 2 MiB tile is already ~5 us of DMA; bigger buys nothing
    if "v6" in kind:
        return 4 << 20   # 16 MiB double-buffered footprint, under the 32 MiB default
    return 8 << 20       # v7x / newer: 3.2 TB/s HBM -> larger tiles cut step-overhead tax


def _choose_tiles(R: int, HW: int, itemsize: int, budget: int):
    """Pick (tile_r, tile_c) obeying the (8,128)-or-full-extent block rule."""
    # Row tile: full extent when small (also covers R not divisible by 8),
    # else 256 rows (multiple of 8; a partial last block is masked by Pallas).
    tile_r = R if R <= 256 else 256

    # Lane tile: fill the byte budget, rounded down to a multiple of 128,
    # clamped to the full lane extent (full extent is always a legal block dim).
    if HW <= 128:
        tile_c = HW
    else:
        lanes = max(128, (budget // (itemsize * tile_r)) // 128 * 128)
        tile_c = HW if lanes >= HW else lanes

    # If the whole (large) array collapsed into a single block, split the lane
    # axis so both v7x TensorCores get a block.  No-op for small arrays.
    total_bytes = R * HW * itemsize
    if tile_r == R and tile_c == HW and HW >= 256 and total_bytes >= (4 << 20):
        tile_c = max(128, ((pl.cdiv(HW, 2) + 127) // 128) * 128)

    return tile_r, tile_c


def normalization_forward(img: jax.Array, mean: jax.Array, std: jax.Array,
                          *, donate_image: bool = False) -> jax.Array:
    """(img - mean[:,None,None]) / std[:,None,None] over an NCHW image."""
    N, C, H, W = img.shape
    R, HW = N * C, H * W
    itemsize = jnp.dtype(img.dtype).itemsize

    # FMA constants in f32 (full precision regardless of image dtype).
    mean32 = jnp.asarray(mean, dtype=jnp.float32).reshape(C)
    std32 = jnp.asarray(std, dtype=jnp.float32).reshape(C)
    scale = 1.0 / std32          # (C,)
    bias = -mean32 / std32       # (C,)

    # Per-row constants: flattened row index = n*C + c.
    # NOTE: for a partial last row block (R % tile_r != 0) the padded rows read
    # arbitrary scale/bias values, but the corresponding output rows are masked
    # by the partial-block store, so this is benign — do not "fix" it.
    scale_rows = jnp.tile(scale, N).reshape(R, 1)
    bias_rows = jnp.tile(bias, N).reshape(R, 1)

    # Lane-dense 2D slab (contiguous reshape, no data movement).
    x2d = img.reshape(R, HW)

    tile_r, tile_c = _choose_tiles(R, HW, itemsize, _tile_byte_budget())
    grid = (pl.cdiv(R, tile_r), pl.cdiv(HW, tile_c))   # lane axis innermost

    # Double-buffered in + out image tiles, plus tiny scale/bias + headroom.
    tile_bytes = tile_r * tile_c * itemsize
    vmem_limit = min(max(4 * tile_bytes + (4 << 20), 16 << 20), 64 << 20)

    out2d = pl.pallas_call(
        _normalize_kernel,
        out_shape=jax.ShapeDtypeStruct((R, HW), img.dtype),
        grid=grid,
        in_specs=[
            pl.BlockSpec((tile_r, tile_c), lambda i, j: (i, j)),
            pl.BlockSpec((tile_r, 1), lambda i, j: (i, 0)),
            pl.BlockSpec((tile_r, 1), lambda i, j: (i, 0)),
        ],
        out_specs=pl.BlockSpec((tile_r, tile_c), lambda i, j: (i, j)),
        compiler_params=pltpu.CompilerParams(
            dimension_semantics=("parallel", "parallel"),
            vmem_limit_bytes=int(vmem_limit)),
        cost_estimate=pl.CostEstimate(
            flops=2 * R * HW,
            transcendentals=0,
            bytes_accessed=2 * R * HW * itemsize + 2 * R * 4),
        # Alias the image buffer in place only when the caller donates it;
        # aliasing a still-live input would force XLA to insert a full HBM copy.
        input_output_aliases={0: 0} if donate_image else {},
    )(x2d, scale_rows, bias_rows)

    return out2d.reshape(N, C, H, W)


if __name__ == "__main__":
    # Standard ImageNet normalization constants, matching Normalization(mean, std)
    # as used in neural style transfer.
    mean = jnp.array([0.485, 0.456, 0.406], dtype=jnp.float32)
    std = jnp.array([0.229, 0.224, 0.225], dtype=jnp.float32)

    # Small NCHW image: batch=2, channels=3, spatial=16x16.
    key = jax.random.PRNGKey(0)
    img = jax.random.uniform(key, (2, 3, 16, 16), dtype=jnp.float32)

    out = normalization_forward(img, mean, std)
    out = jax.block_until_ready(out)

    # Reference check in plain JAX (same broadcasting as PyTorch).
    ref = (img - mean.reshape(-1, 1, 1)) / std.reshape(-1, 1, 1)
    assert out.shape == img.shape
    # FMA rewrite (x*(1/std) + (-mean/std)) differs from (x-mean)/std by ~1 ulp.
    assert jnp.allclose(out, ref, atol=1e-5, rtol=1e-5)

    print("KERNEL_OK")
</pallas_src>

<mosaic_0001>
module attributes {stable_mosaic.version = 11 : i64} {
  func.func @_normalize_kernel(%arg0: i32, %arg1: i32, %arg2: memref<6x256xf32, #tpu.memory_space<vmem>>, %arg3: memref<6x1xf32, #tpu.memory_space<vmem>>, %arg4: memref<6x1xf32, #tpu.memory_space<vmem>>, %arg5: memref<6x256xf32, #tpu.memory_space<vmem>>) attributes {dimension_semantics = [#tpu.dimension_semantics<parallel>, #tpu.dimension_semantics<parallel>], iteration_bounds = array<i64: 1, 1>, scalar_prefetch = 0 : i64, scratch_operands = 0 : i64, tpu.core_type = #tpu.core_type<tc>, window_params = [{transform_indices = @transform_0, window_bounds = array<i64: 6, 256>}, {transform_indices = @transform_1, window_bounds = array<i64: 6, 1>}, {transform_indices = @transform_2, window_bounds = array<i64: 6, 1>}, {transform_indices = @transform_3, window_bounds = array<i64: 6, 256>}]} {
    %c0 = arith.constant 0 : index
    %c0_0 = arith.constant 0 : index
    %0 = vector.load %arg2[%c0, %c0_0] : memref<6x256xf32, #tpu.memory_space<vmem>>, vector<6x256xf32>
    %c0_1 = arith.constant 0 : index
    %c0_2 = arith.constant 0 : index
    %1 = vector.load %arg3[%c0_1, %c0_2] : memref<6x1xf32, #tpu.memory_space<vmem>>, vector<6x1xf32>
    %2 = vector.broadcast %1 : vector<6x1xf32> to vector<6x256xf32>
    %3 = arith.mulf %0, %2 : vector<6x256xf32>
    %c0_3 = arith.constant 0 : index
    %c0_4 = arith.constant 0 : index
    %4 = vector.load %arg4[%c0_3, %c0_4] : memref<6x1xf32, #tpu.memory_space<vmem>>, vector<6x1xf32>
    %5 = vector.broadcast %4 : vector<6x1xf32> to vector<6x256xf32>
    %6 = arith.addf %3, %5 : vector<6x256xf32>
    %c0_5 = arith.constant 0 : index
    %c0_6 = arith.constant 0 : index
    %7 = vector.load %arg5[%c0_5, %c0_6] : memref<6x256xf32, #tpu.memory_space<vmem>>, vector<6x256xf32>
    tpu.vector_store %arg5[%c0_5, %c0_6], %6 {strides = array<i32>} : memref<6x256xf32, #tpu.memory_space<vmem>>, vector<6x256xf32>,
    return
  }
  func.func @transform_0(%arg0: i32, %arg1: i32) -> (i32, i32) {
    %c0_i32 = arith.constant 0 : i32
    return %arg0, %arg1 : i32, i32
  }
  func.func @transform_1(%arg0: i32, %arg1: i32) -> (i32, i32) {
    %c0_i32 = arith.constant 0 : i32
    %c0_i32_0 = arith.constant 0 : i32
    return %arg0, %c0_i32 : i32, i32
  }
  func.func @transform_2(%arg0: i32, %arg1: i32) -> (i32, i32) {
    %c0_i32 = arith.constant 0 : i32
    %c0_i32_0 = arith.constant 0 : i32
    return %arg0, %c0_i32 : i32, i32
  }
  func.func @transform_3(%arg0: i32, %arg1: i32) -> (i32, i32) {
    %c0_i32 = arith.constant 0 : i32
    return %arg0, %arg1 : i32, i32
  }
}

</mosaic_0001>

<llo_original>
// kernel: tpu_custom_call.1
$region0: #{tpu_custom_call.1}
  #allocation0 [shape = 'u32[]', space=smem, size = 0x4, offset = 0x4, fixed_abs, tag = 'smem constant byte address 0x4 - core index']
  #allocation1 [shape = 'u32[144,128]{1,0:T(1,128)}', space=vmem, size = 0x12000, scoped, tag = 'internal scratch']
  %s0 = inlined_call_operand.vmem [shape: f32[6,256], index: 0, kind: input, shape index: {}]
  %s1 = inlined_call_operand.vmem [shape: f32[6,1], index: 1, kind: input, shape index: {}]
  %s2 = inlined_call_operand.vmem [shape: f32[6,1], index: 2, kind: input, shape index: {}]
  %s3 = inlined_call_operand.hbm [shape: f32[6,256], index: 3, kind: output, shape index: {}]
  %s4 = sld [smem:[#allocation0]]
  $region22: #{tpu_custom_call.1} parent=0
    _
  %s6 = ssub.s32 1, %s4
  %s7 = scalar_select 0, %s6, %s4
  $region1: #{tpu_custom_call.1} parent=0
    #allocation2 [shape = 'u8[8192]{0}', space=vmem, size = 0x2000, scoped, tag = 'output window, operand 0, single buffered']
    #allocation3 [shape = 's32[1]{0}', space=sflag, size = 0x4, scoped, tag = 'scoped memory for tpu_custom_call.1']
    %8 = vsyncpa [#allocation3], 0
    // Predicated region
    $region2: #{tpu_custom_call.1} parent=1 // pred_check
      _
    $region3: #{tpu_custom_call.1} parent=1 // pred_check_branch
      %10 = sbr.rel (0) target = $region5
    $region4: #{tpu_custom_call.1} parent=1 // pred_region
      _
    $region5: #{tpu_custom_call.1} parent=1 // pred_fallthru
      _
    // Predicated region
    $region6: #{tpu_custom_call.1} parent=1 // pred_check
      _
    $region7: #{tpu_custom_call.1} parent=1 // pred_check_branch
      %12 = sbr.rel (0) target = $region9
    $region8: #{tpu_custom_call.1} parent=1 // pred_region
      _
    $region9: #{tpu_custom_call.1} parent=1 // pred_fallthru
      _
    // Predicated region
    $region10: #{tpu_custom_call.1} parent=1 // pred_check
      _
    $region11: #{tpu_custom_call.1} parent=1 // pred_check_branch
      %14 = sbr.rel (0) target = $region13
    $region12: #{tpu_custom_call.1} parent=1 // pred_region
      _
    $region13: #{tpu_custom_call.1} parent=1 // pred_fallthru
      _
    %v15 = vld [vmem:[%s0] sm:$0x3f]
    %v16 = vld [vmem:[%s0 + $0x8] sm:$0x3f]
    %v17 = vld [vmem:[%s1] sm:$0x3f]
    %19 = vset.pattern.permute.xlu0 0
    %20 = vperm.xlu0 %19, %v17
    %v21 = vpop.permute.xlu0 %20
    %v23 = vmul.f32 %v15, %v21
    %v24 = vmul.f32 %v16, %v21
    %v25 = vld [vmem:[%s2] sm:$0x3f]
    %27 = vset.pattern.permute.xlu0 0
    %28 = vperm.xlu0 %27, %v25
    %v29 = vpop.permute.xlu0 %28
    %v31 = vadd.f32 %v23, %v29
    %v32 = vadd.f32 %v24, %v29
    %33 = vst [vmem:[#allocation2] sm:$0x3f] %v31
    %34 = vst [vmem:[#allocation2 + $0x8] sm:$0x3f] %v32
    // Predicated region
    $region14: #{tpu_custom_call.1} parent=1 // pred_check
      _
    $region15: #{tpu_custom_call.1} parent=1 // pred_check_branch
      %36 = sbr.rel (0) target = $region17
    $region16: #{tpu_custom_call.1} parent=1 // pred_region
      %s38 = ssub.s32 256, 256
      %39 = vsyncadd [#allocation3], %s38
      %s41 = sshll.u32 [#allocation2], 4
      %s42 = int_to_ptr.vmem [resolvable:$true] %s41
      %44 = dma.vmem_to_hbm [thread:$0]  %s42, 256, %s3, [#allocation3]
    $region17: #{tpu_custom_call.1} parent=1 // pred_fallthru
      _
    // Predicated region
    $region18: #{tpu_custom_call.1} parent=1 // pred_check
      _
    $region19: #{tpu_custom_call.1} parent=1 // pred_check_branch
      %46 = sbr.rel (0) target = $region21
    $region20: #{tpu_custom_call.1} parent=1 // pred_region
      %47 = dma.done [#allocation3], 256
    $region21: #{tpu_custom_call.1} parent=1 // pred_fallthru
      _
    %48 = vsyncpa [#allocation3], 1

</llo_original>
